<compile_context>
chip_gen: v7x
topology: tpu7x:2x2x1
jax: 0.10.0
libtpu: 0.0.40
codegen_flags: <defaults>
</compile_context>

<pallas_src>
import functools

import jax
import jax.numpy as jnp
from jax import lax
from jax.experimental import pallas as pl
from jax.experimental.pallas import tpu as pltpu


def _tensorcores_per_chip() -> int:
    """Best-effort TensorCore count (v7x has 2 TCs/chip; v5e/v6e have 1)."""
    try:
        kind = jax.devices()[0].device_kind.lower()
    except Exception:
        return 1
    if "v7" in kind or "7x" in kind:
        return 2
    return 1


def _make_sse_kernel(*, block_rows, chunk_rows, lane, rows_valid,
                     blocks_per_split, total_blocks, need_mask, has_overhang):
    n_chunks = block_rows // chunk_rows
    groups_per_chunk = chunk_rows // 8
    unroll = min(n_chunks, 8)

    def kernel(x_ref, y_ref, o_ref):
        c = pl.program_id(0)   # row-block shard ("parallel"; one per TC on v7x)
        j = pl.program_id(1)   # row-block within the shard (reduction axis)
        b = c * blocks_per_split + j

        @pl.when(j == 0)
        def _():
            o_ref[...] = jnp.zeros_like(o_ref)

        def run_loop(masked):
            if masked:
                # Hoisted out of the chunk loop: only the scalar row offset
                # changes per iteration.
                rel = lax.broadcasted_iota(jnp.int32, (chunk_rows, lane), 0)
                base = b * block_rows

            def body(g, acc):
                r0 = pl.multiple_of(g * chunk_rows, chunk_rows)
                xg = x_ref[pl.ds(r0, chunk_rows), :].astype(jnp.float32)
                yg = y_ref[pl.ds(r0, chunk_rows), :].astype(jnp.float32)
                d = xg - yg
                sq = d * d
                if masked:
                    rid = (base + r0) + rel
                    sq = jnp.where(rid < rows_valid, sq, jnp.float32(0.0))
                if groups_per_chunk == 1:
                    return acc + sq
                # Regroup sublanes in bands of 8 (layout-preserving) and add on
                # the VPU -> per-(sublane, lane) partial sums; no XLU in loop.
                return acc + sq.reshape(groups_per_chunk, 8, lane).sum(axis=0)

            return lax.fori_loop(0, n_chunks, body,
                                 jnp.zeros((8, lane), jnp.float32),
                                 unroll=unroll)

        def accumulate_unmasked():
            o_ref[...] += run_loop(masked=False)[None]

        def accumulate_masked():
            o_ref[...] += run_loop(masked=True)[None]

        def do_block():
            if need_mask:
                # Only the last valid block pays the mask (iota+cmp+select).
                pl.when(b != total_blocks - 1)(accumulate_unmasked)
                pl.when(b == total_blocks - 1)(accumulate_masked)
            else:
                accumulate_unmasked()

        if has_overhang:
            # Overhanging blocks introduced by cdiv(total_blocks, num_splits)
            # are clamped to the last block in the index_map and skipped here.
            pl.when(b < total_blocks)(do_block)
        else:
            do_block()

    return kernel


def batch_mse_loss(x: jax.Array, y: jax.Array, *, block_elems: int = 1 << 20,
                   chunk_elems: int = 1 << 13, num_splits=None) -> jax.Array:
    """sum((x - y)**2) / x.shape[0], computed with a Pallas TPU kernel."""
    assert x.shape == y.shape, "input and target must have the same shape"
    batch = x.shape[0]
    n = x.size

    itemsize = max(int(jnp.dtype(x.dtype).itemsize), 1)
    # Rows per native sublane tile: 8 for f32, 16 for bf16, 32 for int8.
    row_gran = 8 * max(1, 4 // itemsize)

    xf = x.reshape(-1)
    yf = y.reshape(-1)

    # Lane width: prefer the largest width that divides the element count AND
    # leaves a row count that is a multiple of row_gran (fully dense, no pad).
    lane = None
    for cand in (1024, 512, 256, 128):
        if n % cand == 0 and (n // cand) % row_gran == 0:
            lane = cand
            break
    if lane is None:
        for cand in (1024, 512, 256, 128):
            if n % cand == 0:
                lane = cand
                break

    tail_sse = jnp.float32(0.0)
    if lane is None:
        # Ragged element count: run the kernel on the lane-divisible prefix and
        # fold the (<128-element) tail in with plain jnp (no full-tensor pad).
        # TODO(synk): the prefix slice still costs one copy of the inputs on
        # this rare path; a flat-index mask on a 1-D BlockSpec would avoid it.
        lane = 128
        n_main = (n // lane) * lane
        if n_main:
            xt = xf[n_main:].astype(jnp.float32)
            yt = yf[n_main:].astype(jnp.float32)
            tail_sse = jnp.sum((xt - yt) ** 2)
            xf = xf[:n_main]
            yf = yf[:n_main]

    rows = xf.shape[0] // lane

    if rows < row_gran:
        # Tiny input: not worth a kernel launch; plain jnp is exact and cheap.
        d = x.astype(jnp.float32) - y.astype(jnp.float32)
        return jnp.sum(d * d) / jnp.float32(batch)

    xm = xf.reshape(rows, lane)
    ym = yf.reshape(rows, lane)

    # Row-block size: ~block_elems elements per input per grid step; a multiple
    # of row_gran and never larger than the row count (tail masked in-kernel).
    br_cap = max(row_gran, (block_elems // lane) // row_gran * row_gran)
    if rows >= br_cap:
        block_rows = br_cap
    else:
        block_rows = max(row_gran, rows // row_gran * row_gran)

    chunk_rows = max(row_gran, (chunk_elems // lane) // row_gran * row_gran)
    if block_rows % chunk_rows != 0:
        chunk_rows = row_gran

    total_blocks = pl.cdiv(rows, block_rows)

    if num_splits is None:
        num_splits = _tensorcores_per_chip()
    num_splits = max(1, min(int(num_splits), total_blocks))
    blocks_per_split = pl.cdiv(total_blocks, num_splits)
    has_overhang = num_splits * blocks_per_split != total_blocks
    need_mask = total_blocks * block_rows != rows

    if has_overhang:
        def in_index_map(c, j):
            # Clamp overhang blocks to a valid window (their result is skipped
            # in-kernel), so no out-of-range DMA is ever issued.
            return (jnp.minimum(c * blocks_per_split + j, total_blocks - 1), 0)
    else:
        def in_index_map(c, j):
            return (c * blocks_per_split + j, 0)

    kernel = _make_sse_kernel(
        block_rows=block_rows, chunk_rows=chunk_rows, lane=lane,
        rows_valid=rows, blocks_per_split=blocks_per_split,
        total_blocks=total_blocks, need_mask=need_mask,
        has_overhang=has_overhang)

    in_bytes = rows * lane * 2 * itemsize
    out_bytes = num_splits * 8 * lane * 4
    cost = pl.CostEstimate(flops=3 * rows * lane, transcendentals=0,
                           bytes_accessed=in_bytes + out_bytes)

    partials = pl.pallas_call(
        kernel,
        out_shape=jax.ShapeDtypeStruct((num_splits, 8, lane), jnp.float32),
        grid_spec=pltpu.PrefetchScalarGridSpec(
            num_scalar_prefetch=0,
            grid=(num_splits, blocks_per_split),
            in_specs=[
                pl.BlockSpec((block_rows, lane), in_index_map),
                pl.BlockSpec((block_rows, lane), in_index_map),
            ],
            out_specs=pl.BlockSpec((1, 8, lane), lambda c, j: (c, 0, 0)),
        ),
        compiler_params=pltpu.CompilerParams(
            # Leading axis shards row-block shards across TensorCores on v7x;
            # it serializes harmlessly on 1-TC chips.  The j (reduction) axis
            # MUST stay "arbitrary" (resident-output accumulation).
            # TODO(synk): verify with xprof that "parallel" lands on both v7x
            # cores; if not, switch the leading axis to pltpu.CORE_PARALLEL.
            dimension_semantics=("parallel", "arbitrary"),
            vmem_limit_bytes=32 * 1024 * 1024,
        ),
        cost_estimate=cost,
    )(xm, ym)

    # Tiny final reduction (<= num_splits * 8 * lane f32) + divide by batch.
    return (jnp.sum(partials) + tail_sse) / jnp.float32(batch)


if __name__ == "__main__":
    key = jax.random.PRNGKey(0)
    kx, ky = jax.random.split(key)

    loss_fn = jax.jit(batch_mse_loss)

    # Small NCHW shapes consistent with the module's forward.
    B, C, H, W = 2, 4, 16, 16
    x = jax.random.normal(kx, (B, C, H, W), dtype=jnp.float32)
    y = jax.random.normal(ky, (B, C, H, W), dtype=jnp.float32)
    loss = jax.block_until_ready(loss_fn(x, y))
    ref = jnp.sum((x - y) ** 2) / B
    assert jnp.allclose(loss, ref, rtol=1e-5, atol=1e-5), (loss, ref)

    # Larger check: multi-block path + ragged last block (gated mask path).
    B2, C2, H2, W2 = 2, 3, 512, 512
    kx2, ky2 = jax.random.split(ky)
    x2 = jax.random.normal(kx2, (B2, C2, H2, W2), dtype=jnp.float32)
    y2 = jax.random.normal(ky2, (B2, C2, H2, W2), dtype=jnp.float32)
    loss2 = jax.block_until_ready(loss_fn(x2, y2))
    ref2 = jnp.sum((x2 - y2) ** 2) / B2
    assert jnp.allclose(loss2, ref2, rtol=1e-4, atol=1e-2), (loss2, ref2)

    # Two-shard (v7x-style) split with an odd block count -> overhang block is
    # clamped/skipped, plus a ragged masked tail.  Exercises every code path.
    loss_fn_2s = jax.jit(functools.partial(batch_mse_loss, num_splits=2,
                                           block_elems=1 << 19))
    B3, C3, H3, W3 = 2, 3, 500, 512
    kx3, ky3 = jax.random.split(ky2)
    x3 = jax.random.normal(kx3, (B3, C3, H3, W3), dtype=jnp.float32)
    y3 = jax.random.normal(ky3, (B3, C3, H3, W3), dtype=jnp.float32)
    loss3 = jax.block_until_ready(loss_fn_2s(x3, y3))
    ref3 = jnp.sum((x3 - y3) ** 2) / B3
    assert jnp.allclose(loss3, ref3, rtol=1e-4, atol=1e-2), (loss3, ref3)

    print("KERNEL_OK")
</pallas_src>

<mosaic_0001>
module attributes {stable_mosaic.version = 11 : i64} {
  func.func @kernel(%arg0: i32, %arg1: i32, %arg2: memref<8x256xf32, #tpu.memory_space<vmem>>, %arg3: memref<8x256xf32, #tpu.memory_space<vmem>>, %arg4: memref<1x8x256xf32, #tpu.memory_space<vmem>>) attributes {dimension_semantics = [#tpu.dimension_semantics<parallel>, #tpu.dimension_semantics<arbitrary>], iteration_bounds = array<i64: 1, 1>, scalar_prefetch = 0 : i64, scratch_operands = 0 : i64, tpu.core_type = #tpu.core_type<tc>, window_params = [{transform_indices = @transform_0, window_bounds = array<i64: 8, 256>}, {transform_indices = @transform_1, window_bounds = array<i64: 8, 256>}, {transform_indices = @transform_2, window_bounds = array<i64: 1, 8, 256>}]} {
    %c0_i32 = arith.constant 0 : i32
    %0 = arith.cmpi eq, %arg1, %c0_i32 : i32
    %1 = arith.extui %0 : i1 to i32
    %c0_i32_0 = arith.constant 0 : i32
    %2 = arith.cmpi ne, %1, %c0_i32_0 : i32
    scf.if %2 {
      %cst_9 = arith.constant 0.000000e+00 : f32
      %17 = vector.broadcast %cst_9 : f32 to vector<1x8x256xf32>
      %c0_10 = arith.constant 0 : index
      %c0_11 = arith.constant 0 : index
      %c0_12 = arith.constant 0 : index
      %18 = vector.load %arg4[%c0_10, %c0_11, %c0_12] : memref<1x8x256xf32, #tpu.memory_space<vmem>>, vector<1x8x256xf32>
      tpu.vector_store %arg4[%c0_10, %c0_11, %c0_12], %17 {strides = array<i32>} : memref<1x8x256xf32, #tpu.memory_space<vmem>>, vector<1x8x256xf32>,
    } else {
    }
    %c0 = arith.constant 0 : index
    %c0_1 = arith.constant 0 : index
    %c0_2 = arith.constant 0 : index
    %3 = vector.load %arg4[%c0, %c0_1, %c0_2] : memref<1x8x256xf32, #tpu.memory_space<vmem>>, vector<1x8x256xf32>
    %cst = arith.constant 0.000000e+00 : f32
    %4 = vector.broadcast %cst : f32 to vector<8x256xf32>
    %c0_i32_3 = arith.constant 0 : i32
    %c8_i32 = arith.constant 8 : i32
    %5 = arith.muli %c0_i32_3, %c8_i32 : i32
    %6 = tpu.assume_multiple %5, 8 : i32
    %7 = arith.index_cast %6 : i32 to index
    %c0_4 = arith.constant 0 : index
    %8 = vector.load %arg2[%7, %c0_4] : memref<8x256xf32, #tpu.memory_space<vmem>>, vector<8x256xf32>
    %9 = arith.index_cast %6 : i32 to index
    %c0_5 = arith.constant 0 : index
    %10 = vector.load %arg3[%9, %c0_5] : memref<8x256xf32, #tpu.memory_space<vmem>>, vector<8x256xf32>
    %11 = arith.subf %8, %10 : vector<8x256xf32>
    %12 = arith.mulf %11, %11 : vector<8x256xf32>
    %13 = arith.addf %4, %12 : vector<8x256xf32>
    %c1_i32 = arith.constant 1 : i32
    %14 = vector.shape_cast %13 : vector<8x256xf32> to vector<1x8x256xf32>
    %15 = arith.addf %3, %14 : vector<1x8x256xf32>
    %c0_6 = arith.constant 0 : index
    %c0_7 = arith.constant 0 : index
    %c0_8 = arith.constant 0 : index
    %16 = vector.load %arg4[%c0_6, %c0_7, %c0_8] : memref<1x8x256xf32, #tpu.memory_space<vmem>>, vector<1x8x256xf32>
    tpu.vector_store %arg4[%c0_6, %c0_7, %c0_8], %15 {strides = array<i32>} : memref<1x8x256xf32, #tpu.memory_space<vmem>>, vector<1x8x256xf32>,
    return
  }
  func.func @transform_0(%arg0: i32, %arg1: i32) -> (i32, i32) {
    %c1_i32 = arith.constant 1 : i32
    %0 = arith.muli %arg0, %c1_i32 : i32
    %1 = arith.addi %0, %arg1 : i32
    %c0_i32 = arith.constant 0 : i32
    %c0_i32_0 = arith.constant 0 : i32
    return %1, %c0_i32 : i32, i32
  }
  func.func @transform_1(%arg0: i32, %arg1: i32) -> (i32, i32) {
    %c1_i32 = arith.constant 1 : i32
    %0 = arith.muli %arg0, %c1_i32 : i32
    %1 = arith.addi %0, %arg1 : i32
    %c0_i32 = arith.constant 0 : i32
    %c0_i32_0 = arith.constant 0 : i32
    return %1, %c0_i32 : i32, i32
  }
  func.func @transform_2(%arg0: i32, %arg1: i32) -> (i32, i32, i32) {
    %c0_i32 = arith.constant 0 : i32
    %c0_i32_0 = arith.constant 0 : i32
    %c0_i32_1 = arith.constant 0 : i32
    return %arg0, %c0_i32, %c0_i32_0 : i32, i32, i32
  }
}

</mosaic_0001>

<llo_original>
// kernel: batch_mse_loss.1
$region0: #{batch_mse_loss.1}
  #allocation0 [shape = 'u32[]', space=smem, size = 0x4, offset = 0x4, fixed_abs, tag = 'smem constant byte address 0x4 - core index']
  #allocation1 [shape = 'u32[144,128]{1,0:T(1,128)}', space=vmem, size = 0x12000, scoped, tag = 'internal scratch']
  %s0 = inlined_call_operand.vmem [shape: f32[8,256], index: 0, kind: input, shape index: {}]
  %s1 = inlined_call_operand.vmem [shape: f32[8,256], index: 1, kind: input, shape index: {}]
  %s2 = inlined_call_operand.vmem [shape: f32[1,8,256], index: 2, kind: output, shape index: {}]
  %s3 = sld [smem:[#allocation0]]
  $region22: #{batch_mse_loss.1} parent=0
    _
  %s5 = ssub.s32 1, %s3
  %s6 = scalar_select 0, %s5, %s3
  // Predicated region
  $region2: #{batch_mse_loss.1} parent=0 // pred_check
    _
  $region3: #{batch_mse_loss.1} parent=0 // pred_check_branch
    %8 = sbr.rel (0) target = $region5
  $region4: #{batch_mse_loss.1} parent=0 // pred_region
    %s9 = sadd.s32 0, 0
    %p10 = scmp.lt.s32.totalorder %s9, 0
    %s11 = scalar_select %p10, %s9, 0
    %s12 = smul.addr %s11, 2
    %s13 = smul.addr %s12, 8
    %s14 = scalar_lea.vmem %s0, %s13
    %s15 = sadd.s32 0, 0
  $region5: #{batch_mse_loss.1} parent=0 // pred_fallthru
    _
  // Predicated region
  $region6: #{batch_mse_loss.1} parent=0 // pred_check
    _
  $region7: #{batch_mse_loss.1} parent=0 // pred_check_branch
    %17 = sbr.rel (0) target = $region9
  $region8: #{batch_mse_loss.1} parent=0 // pred_region
    %s18 = sadd.s32 0, 0
    %p19 = scmp.lt.s32.totalorder %s18, 0
    %s20 = scalar_select %p19, %s18, 0
    %s21 = smul.addr %s20, 2
    %s22 = smul.addr %s21, 8
    %s23 = scalar_lea.vmem %s1, %s22
    %s24 = sadd.s32 0, 0
  $region9: #{batch_mse_loss.1} parent=0 // pred_fallthru
    _
  %s25 = sadd.s32 0, 0
  %p26 = scmp.lt.s32.totalorder %s25, 0
  %s27 = scalar_select %p26, %s25, 0
  %s28 = smul.addr %s27, 2
  %s29 = smul.addr %s28, 8
  %s30 = scalar_lea.vmem %s0, %s29
  %s31 = sadd.s32 0, 0
  %p32 = scmp.lt.s32.totalorder %s31, 0
  %s33 = scalar_select %p32, %s31, 0
  %s34 = smul.addr %s33, 2
  %s35 = smul.addr %s34, 8
  %s36 = scalar_lea.vmem %s1, %s35
  %s37 = sadd.s32 0, 0
  %p38 = scmp.lt.s32.totalorder %s37, 0
  %s39 = scalar_select %p38, %s37, 0
  %s40 = smul.addr %s39, 2
  %s41 = smul.addr %s40, 8
  %s42 = scalar_lea.vmem %s0, %s41
  %s43 = sadd.s32 0, 0
  %s44 = sadd.s32 0, 0
  %p45 = scmp.lt.s32.totalorder %s44, 0
  %s46 = scalar_select %p45, %s44, 0
  %s47 = smul.addr %s46, 2
  %s48 = smul.addr %s47, 8
  %s49 = scalar_lea.vmem %s1, %s48
  %s50 = sadd.s32 0, 0
  %p51 = scmp.eq.s32.totalorder 0, 0
  // Predicated region
  $region10: #{batch_mse_loss.1} parent=0 // pred_check
    %p52 = pneg %p51
  $region11: #{batch_mse_loss.1} parent=0 // pred_check_branch
    %54 = sbr.rel (%p52) target = $region13
  $region12: #{batch_mse_loss.1} parent=0 // pred_region
    %55 = vst [vmem:[%s2] sm:$0xff] 0.0
    %56 = vst [vmem:[%s2 + $0x8] sm:$0xff] 0.0
  $region13: #{batch_mse_loss.1} parent=0 // pred_fallthru
    _
  %v57 = vld [vmem:[%s2] sm:$0xff]
  %v58 = vld [vmem:[%s2 + $0x8] sm:$0xff]
  %s59 = smul.u32 0, 2
  %s60 = smul.addr %s59, 8
  %s61 = scalar_lea.vmem %s42, %s60
  %v62 = vld [vmem:[%s61] sm:$0xff]
  %v63 = vld [vmem:[%s61 + $0x8] sm:$0xff]
  %s64 = smul.addr %s59, 8
  %s65 = scalar_lea.vmem %s49, %s64
  %v66 = vld [vmem:[%s65] sm:$0xff]
  %v67 = vld [vmem:[%s65 + $0x8] sm:$0xff]
  %v68 = vsub.f32 %v62, %v66
  %v69 = vsub.f32 %v63, %v67
  %v70 = vmul.f32 %v68, %v68
  %v71 = vmul.f32 %v69, %v69
  %v72 = vadd.f32 %v70, 0.0
  %v73 = vadd.f32 %v71, 0.0
  %v74 = vadd.f32 %v57, %v72
  %v75 = vadd.f32 %v58, %v73
  %76 = vst [vmem:[%s2] sm:$0xff] %v74
  %77 = vst [vmem:[%s2 + $0x8] sm:$0xff] %v75
  // Predicated region
  $region14: #{batch_mse_loss.1} parent=0 // pred_check
    _
  $region15: #{batch_mse_loss.1} parent=0 // pred_check_branch
    %79 = sbr.rel (0) target = $region17
  $region16: #{batch_mse_loss.1} parent=0 // pred_region
    _
  $region17: #{batch_mse_loss.1} parent=0 // pred_fallthru
    _
  // Predicated region
  $region18: #{batch_mse_loss.1} parent=0 // pred_check
    _
  $region19: #{batch_mse_loss.1} parent=0 // pred_check_branch
    %81 = sbr.rel (0) target = $region21
  $region20: #{batch_mse_loss.1} parent=0 // pred_region
    _
  $region21: #{batch_mse_loss.1} parent=0 // pred_fallthru
    _

</llo_original>
